<compile_context>
chip_gen: v6e
topology: v6e:2x2x1
jax: 0.10.0
libtpu: 0.0.40
codegen_flags: <defaults>
</compile_context>

<pallas_src>
import functools

import jax
import jax.numpy as jnp
from jax.experimental import pallas as pl
from jax.experimental.pallas import tpu as pltpu

_LANE = 128      # lane width (last dim)
_SUBLANE = 8     # f32 sublane height (second-to-last dim)
_BLOCK_B = 128   # batch tile for the gridded (large-batch) path


def _round_up(n, m):
    return ((n + m - 1) // m) * m


def _fused_mlp_kernel(*refs, n_layers):
    """refs = (x_ref, w1_ref, b1_ref, ..., wN_ref, bN_ref, o_ref).

    Entire MLP runs on one activation tile; intermediates live in vregs/VMEM
    only. Final layer skips ReLU (matches nn.Sequential with trailing ReLU
    popped). Weights are bf16, biases/activations f32, matmuls accumulate f32.
    """
    x_ref = refs[0]
    o_ref = refs[-1]
    h = x_ref[...]  # (tileB, Fp_in) f32, lane-dense
    for i in range(n_layers):
        w_ref = refs[1 + 2 * i]  # (Fp_in_i, Fp_out_i) bf16
        b_ref = refs[2 + 2 * i]  # (1, Fp_out_i) f32
        h = jnp.dot(h.astype(jnp.bfloat16), w_ref[...],
                    preferred_element_type=jnp.float32)
        h = h + b_ref[...]
        if i < n_layers - 1:
            h = jnp.maximum(h, 0.0)
    o_ref[...] = h  # f32, lane-dense -> unmasked store


def init_linear_qnet_params(layer_sizes, key):
    """Deterministic params mirroring nn.Linear shapes.

    Returns a list of (w_t, b) with w_t = (in, out), b = (1, out), f32 — the
    unpadded 'ground truth' used by the pure-JAX references.
    """
    params = []
    for before, after in zip(layer_sizes[:-1], layer_sizes[1:]):
        key, kw, kb = jax.random.split(key, 3)
        bound = 1.0 / jnp.sqrt(jnp.float32(before))
        w = jax.random.uniform(kw, (after, before), jnp.float32, -bound, bound)
        b = jax.random.uniform(kb, (1, after), jnp.float32, -bound, bound)
        params.append((w.T, b))  # store transposed weight: (in, out)
    return params


def pad_params(params):
    """Zero-pad weights/biases to lane-dense shapes; weights cast to bf16 once."""
    padded = []
    for w_t, b in params:
        f_in, f_out = w_t.shape
        f_in_p = _round_up(f_in, _LANE)
        f_out_p = _round_up(f_out, _LANE)
        w_p = (jnp.zeros((f_in_p, f_out_p), jnp.float32)
               .at[:f_in, :f_out].set(w_t)
               .astype(jnp.bfloat16))
        b_p = jnp.zeros((1, f_out_p), jnp.float32).at[:, :f_out].set(b)
        padded.append((w_p, b_p))
    return padded


@functools.partial(jax.jit, static_argnames=("out_features", "block_b"))
def linear_qnet_forward(x, padded_params, *, out_features, block_b=_BLOCK_B):
    """Fused forward pass: one pallas_call for the whole MLP (pad/slice fused under jit)."""
    B, F_in = x.shape
    Fp_in = padded_params[0][0].shape[0]
    Fp_out = padded_params[-1][0].shape[1]
    n_layers = len(padded_params)
    flat = [t for wb in padded_params for t in wb]
    kernel = functools.partial(_fused_mlp_kernel, n_layers=n_layers)
    compiler_params_common = dict(vmem_limit_bytes=16 * 1024 * 1024)

    if B <= block_b:
        # Single-tile path: no grid -> no pipeline scaffolding, no double buffering.
        Bp = _round_up(B, _SUBLANE)
        x_p = jax.lax.pad(x.astype(jnp.float32), jnp.float32(0.0),
                          ((0, Bp - B, 0), (0, Fp_in - F_in, 0)))
        out_p = pl.pallas_call(
            kernel,
            out_shape=jax.ShapeDtypeStruct((Bp, Fp_out), jnp.float32),
            in_specs=[pl.BlockSpec(memory_space=pltpu.MemorySpace.VMEM)] * (1 + len(flat)),
            out_specs=pl.BlockSpec(memory_space=pltpu.MemorySpace.VMEM),
            compiler_params=pltpu.CompilerParams(**compiler_params_common),
        )(x_p, *flat)
        return out_p[:B, :out_features]

    # Batched path: tile the batch, keep weights VMEM-resident (constant index_map),
    # mark the batch axis "parallel" so v7x's two TensorCores split the tiles.
    Bp = _round_up(B, block_b)
    x_p = jax.lax.pad(x.astype(jnp.float32), jnp.float32(0.0),
                      ((0, Bp - B, 0), (0, Fp_in - F_in, 0)))
    in_specs = [pl.BlockSpec((block_b, Fp_in), lambda i: (i, 0))]
    for p in flat:
        in_specs.append(pl.BlockSpec(p.shape, lambda i: (0, 0)))
    out_p = pl.pallas_call(
        kernel,
        out_shape=jax.ShapeDtypeStruct((Bp, Fp_out), jnp.float32),
        grid=(Bp // block_b,),
        in_specs=in_specs,
        out_specs=pl.BlockSpec((block_b, Fp_out), lambda i: (i, 0)),
        compiler_params=pltpu.CompilerParams(
            dimension_semantics=("parallel",), **compiler_params_common),
    )(x_p, *flat)
    return out_p[:B, :out_features]


def linear_qnet_reference_kernel_math(x, params):
    """Pure-JAX reference that mirrors the kernel math (bf16 inputs, f32 accum)."""
    n = len(params)
    h = x.astype(jnp.float32)
    for i, (w_t, b) in enumerate(params):
        h = jnp.dot(h.astype(jnp.bfloat16), w_t.astype(jnp.bfloat16),
                    preferred_element_type=jnp.float32) + b
        if i < n - 1:
            h = jnp.maximum(h, 0.0)
    return h


def linear_qnet_reference_f32(x, params):
    """Pure-JAX full-f32 reference (PyTorch module semantics)."""
    n = len(params)
    h = x
    for i, (w_t, b) in enumerate(params):
        h = h @ w_t + b
        if i < n - 1:
            h = jnp.maximum(h, 0.0)
    return h


if __name__ == "__main__":
    # 3-layer Q-net, small shapes consistent with the module.
    layer_sizes = [16, 32, 32, 4]

    key = jax.random.PRNGKey(0)
    k_params, kx_small, kx_big = jax.random.split(key, 3)

    params = init_linear_qnet_params(layer_sizes, k_params)
    padded = pad_params(params)

    # --- small batch: grid-free single-tile path ---
    x_small = jax.random.normal(kx_small, (2, layer_sizes[0]), jnp.float32)
    out_small = jax.block_until_ready(
        linear_qnet_forward(x_small, padded, out_features=layer_sizes[-1]))
    assert out_small.shape == (2, layer_sizes[-1])
    ref_small = linear_qnet_reference_kernel_math(x_small, params)
    assert jnp.allclose(out_small, ref_small, atol=1e-4, rtol=1e-4)
    # loose check against full-f32 module semantics (bf16 weight quantization only)
    ref_small_f32 = linear_qnet_reference_f32(x_small, params)
    assert jnp.allclose(out_small, ref_small_f32, atol=5e-2, rtol=5e-2)

    # --- larger batch: 128-row tiles, "parallel" batch grid ---
    x_big = jax.random.normal(kx_big, (300, layer_sizes[0]), jnp.float32)
    out_big = jax.block_until_ready(
        linear_qnet_forward(x_big, padded, out_features=layer_sizes[-1]))
    assert out_big.shape == (300, layer_sizes[-1])
    ref_big = linear_qnet_reference_kernel_math(x_big, params)
    assert jnp.allclose(out_big, ref_big, atol=1e-4, rtol=1e-4)

    print("KERNEL_OK")
</pallas_src>

<mosaic_0001>
module attributes {stable_mosaic.version = 11 : i64} {
  func.func @_fused_mlp_kernel(%arg0: memref<8x128xf32, #tpu.memory_space<vmem>>, %arg1: memref<128x128xbf16, #tpu.memory_space<vmem>>, %arg2: memref<1x128xf32, #tpu.memory_space<vmem>>, %arg3: memref<128x128xbf16, #tpu.memory_space<vmem>>, %arg4: memref<1x128xf32, #tpu.memory_space<vmem>>, %arg5: memref<128x128xbf16, #tpu.memory_space<vmem>>, %arg6: memref<1x128xf32, #tpu.memory_space<vmem>>, %arg7: memref<8x128xf32, #tpu.memory_space<vmem>>) attributes {dimension_semantics = [], scalar_prefetch = 0 : i64, scratch_operands = 0 : i64, tpu.core_type = #tpu.core_type<tc>} {
    %c0 = arith.constant 0 : index
    %c0_0 = arith.constant 0 : index
    %0 = vector.load %arg0[%c0, %c0_0] : memref<8x128xf32, #tpu.memory_space<vmem>>, vector<8x128xf32>
    %1 = arith.truncf %0 : vector<8x128xf32> to vector<8x128xbf16>
    %c0_1 = arith.constant 0 : index
    %c0_2 = arith.constant 0 : index
    %2 = vector.load %arg1[%c0_1, %c0_2] : memref<128x128xbf16, #tpu.memory_space<vmem>>, vector<128x128xbf16>
    %cst = arith.constant dense<0.000000e+00> : vector<8x128xf32>
    %3 = tpu.matmul %1, %2, %cst {dimension_numbers = #tpu.dot_dimension_numbers<[1], [0], [0], [1], [0, 0, 1, 1], [], []>} : vector<8x128xbf16>, vector<128x128xbf16>, vector<8x128xf32> -> vector<8x128xf32>
    %c0_3 = arith.constant 0 : index
    %c0_4 = arith.constant 0 : index
    %4 = vector.load %arg2[%c0_3, %c0_4] : memref<1x128xf32, #tpu.memory_space<vmem>>, vector<1x128xf32>
    %5 = vector.broadcast %4 : vector<1x128xf32> to vector<8x128xf32>
    %6 = arith.addf %3, %5 : vector<8x128xf32>
    %cst_5 = arith.constant 0.000000e+00 : f32
    %7 = vector.broadcast %cst_5 : f32 to vector<8x128xf32>
    %8 = arith.maximumf %6, %7 : vector<8x128xf32>
    %9 = arith.truncf %8 : vector<8x128xf32> to vector<8x128xbf16>
    %c0_6 = arith.constant 0 : index
    %c0_7 = arith.constant 0 : index
    %10 = vector.load %arg3[%c0_6, %c0_7] : memref<128x128xbf16, #tpu.memory_space<vmem>>, vector<128x128xbf16>
    %cst_8 = arith.constant dense<0.000000e+00> : vector<8x128xf32>
    %11 = tpu.matmul %9, %10, %cst_8 {dimension_numbers = #tpu.dot_dimension_numbers<[1], [0], [0], [1], [0, 0, 1, 1], [], []>} : vector<8x128xbf16>, vector<128x128xbf16>, vector<8x128xf32> -> vector<8x128xf32>
    %c0_9 = arith.constant 0 : index
    %c0_10 = arith.constant 0 : index
    %12 = vector.load %arg4[%c0_9, %c0_10] : memref<1x128xf32, #tpu.memory_space<vmem>>, vector<1x128xf32>
    %13 = vector.broadcast %12 : vector<1x128xf32> to vector<8x128xf32>
    %14 = arith.addf %11, %13 : vector<8x128xf32>
    %cst_11 = arith.constant 0.000000e+00 : f32
    %15 = vector.broadcast %cst_11 : f32 to vector<8x128xf32>
    %16 = arith.maximumf %14, %15 : vector<8x128xf32>
    %17 = arith.truncf %16 : vector<8x128xf32> to vector<8x128xbf16>
    %c0_12 = arith.constant 0 : index
    %c0_13 = arith.constant 0 : index
    %18 = vector.load %arg5[%c0_12, %c0_13] : memref<128x128xbf16, #tpu.memory_space<vmem>>, vector<128x128xbf16>
    %cst_14 = arith.constant dense<0.000000e+00> : vector<8x128xf32>
    %19 = tpu.matmul %17, %18, %cst_14 {dimension_numbers = #tpu.dot_dimension_numbers<[1], [0], [0], [1], [0, 0, 1, 1], [], []>} : vector<8x128xbf16>, vector<128x128xbf16>, vector<8x128xf32> -> vector<8x128xf32>
    %c0_15 = arith.constant 0 : index
    %c0_16 = arith.constant 0 : index
    %20 = vector.load %arg6[%c0_15, %c0_16] : memref<1x128xf32, #tpu.memory_space<vmem>>, vector<1x128xf32>
    %21 = vector.broadcast %20 : vector<1x128xf32> to vector<8x128xf32>
    %22 = arith.addf %19, %21 : vector<8x128xf32>
    %c0_17 = arith.constant 0 : index
    %c0_18 = arith.constant 0 : index
    %23 = vector.load %arg7[%c0_17, %c0_18] : memref<8x128xf32, #tpu.memory_space<vmem>>, vector<8x128xf32>
    tpu.vector_store %arg7[%c0_17, %c0_18], %22 {strides = array<i32>} : memref<8x128xf32, #tpu.memory_space<vmem>>, vector<8x128xf32>,
    return
  }
}

</mosaic_0001>

<llo_original>
// kernel: linear_qnet_forward.1
$region0: #{linear_qnet_forward.1}
  #allocation0 [shape = 'u32[]', space=smem, size = 0x4, offset = 0x4, fixed_abs, tag = 'smem constant byte address 0x4 - core index']
  #allocation1 [shape = 'u32[144,128]{1,0:T(1,128)}', space=vmem, size = 0x12000, scoped, tag = 'internal scratch']
  %s0 = inlined_call_operand.vmem [shape: f32[8,128], index: 0, kind: input, shape index: {}]
  %s1 = inlined_call_operand.hbm [shape: bf16[128,128], index: 1, kind: input, shape index: {}]
  %s2 = inlined_call_operand.vmem [shape: f32[1,128], index: 2, kind: input, shape index: {}]
  %s3 = inlined_call_operand.hbm [shape: bf16[128,128], index: 3, kind: input, shape index: {}]
  %s4 = inlined_call_operand.vmem [shape: f32[1,128], index: 4, kind: input, shape index: {}]
  %s5 = inlined_call_operand.hbm [shape: bf16[128,128], index: 5, kind: input, shape index: {}]
  %s6 = inlined_call_operand.vmem [shape: f32[1,128], index: 6, kind: input, shape index: {}]
  %s7 = inlined_call_operand.vmem [shape: f32[8,128], index: 7, kind: output, shape index: {}]
  %s8 = sld [smem:[#allocation0]]
  $region50: #{linear_qnet_forward.1} parent=0
    _
  %s10 = ssub.s32 1, %s8
  %s11 = scalar_select 0, %s10, %s8
  $region1: #{linear_qnet_forward.1} parent=0
    #allocation2 [shape = 'u8[32768]{0}', space=vmem, size = 0x8000, scoped, tag = 'input window, operand 1, single buffered']
    #allocation3 [shape = 's32[1]{0}', space=sflag, size = 0x4, scoped, tag = 'scoped memory for linear_qnet_forward.1']
    #allocation4 [shape = 'u8[32768]{0}', space=vmem, size = 0x8000, scoped, tag = 'input window, operand 3, single buffered']
    #allocation5 [shape = 's32[1]{0}', space=sflag, size = 0x4, scoped, tag = 'scoped memory for linear_qnet_forward.1']
    #allocation6 [shape = 'u8[32768]{0}', space=vmem, size = 0x8000, scoped, tag = 'input window, operand 5, single buffered']
    %12 = vsyncpa [#allocation3], 0
    %13 = vsyncpa [#allocation5], 0
    // Predicated region
    $region2: #{linear_qnet_forward.1} parent=1 // pred_check
      _
    $region3: #{linear_qnet_forward.1} parent=1 // pred_check_branch
      %15 = sbr.rel (0) target = $region5
    $region4: #{linear_qnet_forward.1} parent=1 // pred_region
      _
    $region5: #{linear_qnet_forward.1} parent=1 // pred_fallthru
      _
    // Predicated region
    $region6: #{linear_qnet_forward.1} parent=1 // pred_check
      _
    $region7: #{linear_qnet_forward.1} parent=1 // pred_check_branch
      %17 = sbr.rel (0) target = $region9
    $region8: #{linear_qnet_forward.1} parent=1 // pred_region
      %s19 = ssub.s32 1024, 1024
      %20 = vsyncadd [#allocation3], %s19
      %s21 = sshll.u32 [#allocation2], 4
      %s22 = int_to_ptr.vmem [resolvable:$true] %s21
      %27 = dma.hbm_to_vmem [thread:$0]  %s1, 1024, %s22, [#allocation3], 64, 64, 4
    $region9: #{linear_qnet_forward.1} parent=1 // pred_fallthru
      _
    // Predicated region
    $region10: #{linear_qnet_forward.1} parent=1 // pred_check
      _
    $region11: #{linear_qnet_forward.1} parent=1 // pred_check_branch
      %29 = sbr.rel (0) target = $region13
    $region12: #{linear_qnet_forward.1} parent=1 // pred_region
      _
    $region13: #{linear_qnet_forward.1} parent=1 // pred_fallthru
      _
    // Predicated region
    $region14: #{linear_qnet_forward.1} parent=1 // pred_check
      _
    $region15: #{linear_qnet_forward.1} parent=1 // pred_check_branch
      %31 = sbr.rel (0) target = $region17
    $region16: #{linear_qnet_forward.1} parent=1 // pred_region
      %s33 = ssub.s32 1024, 1024
      %34 = vsyncadd [#allocation5], %s33
      %s35 = sshll.u32 [#allocation4], 4
      %s36 = int_to_ptr.vmem [resolvable:$true] %s35
      %41 = dma.hbm_to_vmem [thread:$0]  %s3, 1024, %s36, [#allocation5], 64, 64, 4
    $region17: #{linear_qnet_forward.1} parent=1 // pred_fallthru
      _
    // Predicated region
    $region18: #{linear_qnet_forward.1} parent=1 // pred_check
      _
    $region19: #{linear_qnet_forward.1} parent=1 // pred_check_branch
      %43 = sbr.rel (0) target = $region21
    $region20: #{linear_qnet_forward.1} parent=1 // pred_region
      _
    $region21: #{linear_qnet_forward.1} parent=1 // pred_fallthru
      _
    // Predicated region
    $region22: #{linear_qnet_forward.1} parent=1 // pred_check
      _
    $region23: #{linear_qnet_forward.1} parent=1 // pred_check_branch
      %45 = sbr.rel (0) target = $region25
    $region24: #{linear_qnet_forward.1} parent=1 // pred_region
      %s47 = ssub.s32 1024, 1024
      %48 = vsyncadd [#allocation5], %s47
      %s49 = sshll.u32 [#allocation6], 4
      %s50 = int_to_ptr.vmem [resolvable:$true] %s49
      %55 = dma.hbm_to_vmem [thread:$0]  %s5, 1024, %s50, [#allocation5], 64, 64, 4
    $region25: #{linear_qnet_forward.1} parent=1 // pred_fallthru
      _
    // Predicated region
    $region26: #{linear_qnet_forward.1} parent=1 // pred_check
      _
    $region27: #{linear_qnet_forward.1} parent=1 // pred_check_branch
      %57 = sbr.rel (0) target = $region29
    $region28: #{linear_qnet_forward.1} parent=1 // pred_region
      _
    $region29: #{linear_qnet_forward.1} parent=1 // pred_fallthru
      _
    // Predicated region
    $region30: #{linear_qnet_forward.1} parent=1 // pred_check
      _
    $region31: #{linear_qnet_forward.1} parent=1 // pred_check_branch
      %59 = sbr.rel (0) target = $region33
    $region32: #{linear_qnet_forward.1} parent=1 // pred_region
      %60 = dma.done [#allocation3], 1024
    $region33: #{linear_qnet_forward.1} parent=1 // pred_fallthru
      _
    // Predicated region
    $region34: #{linear_qnet_forward.1} parent=1 // pred_check
      _
    $region35: #{linear_qnet_forward.1} parent=1 // pred_check_branch
      %62 = sbr.rel (0) target = $region37
    $region36: #{linear_qnet_forward.1} parent=1 // pred_region
      %63 = dma.done [#allocation5], 1024
    $region37: #{linear_qnet_forward.1} parent=1 // pred_fallthru
      _
    // Predicated region
    $region38: #{linear_qnet_forward.1} parent=1 // pred_check
      _
    $region39: #{linear_qnet_forward.1} parent=1 // pred_check_branch
      %65 = sbr.rel (0) target = $region41
    $region40: #{linear_qnet_forward.1} parent=1 // pred_region
      %66 = dma.done [#allocation5], 1024
    $region41: #{linear_qnet_forward.1} parent=1 // pred_fallthru
      _
    %v68 = vld [vmem:[%s0] sm:$0xff]
    %v69 = vpack.c.bf16 %v68, %v68
    %v70 = vld [vmem:[#allocation2] sm:$0xf]
    %v71 = vld [vmem:[#allocation2 + $0x4] sm:$0xf]
    %v72 = vld [vmem:[#allocation2 + $0x8] sm:$0xf]
    %v73 = vld [vmem:[#allocation2 + $0xc] sm:$0xf]
    %v74 = vld [vmem:[#allocation2 + $0x10] sm:$0xf]
    %v75 = vld [vmem:[#allocation2 + $0x14] sm:$0xf]
    %v76 = vld [vmem:[#allocation2 + $0x18] sm:$0xf]
    %v77 = vld [vmem:[#allocation2 + $0x1c] sm:$0xf]
    %v78 = vld [vmem:[#allocation2 + $0x20] sm:$0xf]
    %v79 = vld [vmem:[#allocation2 + $0x24] sm:$0xf]
    %v80 = vld [vmem:[#allocation2 + $0x28] sm:$0xf]
    %v81 = vld [vmem:[#allocation2 + $0x2c] sm:$0xf]
    %v82 = vld [vmem:[#allocation2 + $0x30] sm:$0xf]
    %v83 = vld [vmem:[#allocation2 + $0x34] sm:$0xf]
    %v84 = vld [vmem:[#allocation2 + $0x38] sm:$0xf]
    %v85 = vld [vmem:[#allocation2 + $0x3c] sm:$0xf]
    %v86 = vld [vmem:[%s2] sm:$0x1]
    %v88 = vlaneseq
    %v89 = vshrl.u32 %v88, 7
    %v90 = vsub.s32 0, %v89
    %v91 = vrot.slane %v86, %v90
    %v109 = vunpack.c.l.b16 %v70
    %v110 = vunpack.c.l.b16 %v71
    %v111 = vunpack.c.l.b16 %v72
    %v112 = vunpack.c.l.b16 %v73
    %v113 = vunpack.c.l.b16 %v74
    %v114 = vunpack.c.l.b16 %v75
    %v115 = vunpack.c.l.b16 %v76
    %v116 = vunpack.c.l.b16 %v77
    %v117 = vunpack.c.l.b16 %v78
    %v118 = vunpack.c.l.b16 %v79
    %v119 = vunpack.c.l.b16 %v80
    %v120 = vunpack.c.l.b16 %v81
    %v121 = vunpack.c.l.b16 %v82
    %v122 = vunpack.c.l.b16 %v83
    %v123 = vunpack.c.l.b16 %v84
    %v124 = vunpack.c.l.b16 %v85
    %v125 = vpack.c.b16 %v110, %v109
    %v126 = vpack.c.b16 %v112, %v111
    %v127 = vpack.c.b16 %v114, %v113
    %v128 = vpack.c.b16 %v116, %v115
    %v129 = vpack.c.b16 %v118, %v117
    %v130 = vpack.c.b16 %v120, %v119
    %v131 = vpack.c.b16 %v122, %v121
    %v132 = vpack.c.b16 %v124, %v123
    %141 = vmatprep.subr.bf16.mxu0 0
    %142 = vmatpush1.bf16.msra.mxu0 %v132
    %143 = vmatprep.subr.bf16.mxu0 0
    %144 = vmatpush1.bf16.msra.mxu0 %v131
    %145 = vmatprep.subr.bf16.mxu0 0
    %146 = vmatpush1.bf16.msra.mxu0 %v130
    %147 = vmatprep.subr.bf16.mxu0 0
    %148 = vmatpush1.bf16.msra.mxu0 %v129
    %149 = vmatprep.subr.bf16.mxu0 0
    %150 = vmatpush1.bf16.msra.mxu0 %v128
    %151 = vmatprep.subr.bf16.mxu0 0
    %152 = vmatpush1.bf16.msra.mxu0 %v127
    %153 = vmatprep.subr.bf16.mxu0 0
    %154 = vmatpush1.bf16.msra.mxu0 %v126
    %155 = vmatprep.subr.bf16.mxu0 0
    %156 = vmatpush1.bf16.msra.mxu0 %v125
    %157 = vmatprep.subr.bf16.mxu0 0
    %158 = vmatpush2.bf16.msra.mxu0 0
    %159 = vmatprep.subr.bf16.mxu0 0
    %160 = vmatpush2.bf16.msra.mxu0 0
    %161 = vmatprep.subr.bf16.mxu0 0
    %162 = vmatpush2.bf16.msra.mxu0 0
    %163 = vmatprep.subr.bf16.mxu0 0
    %164 = vmatpush2.bf16.msra.mxu0 0
    %165 = vmatprep.subr.bf16.mxu0 0
    %166 = vmatpush2.bf16.msra.mxu0 0
    %167 = vmatprep.subr.bf16.mxu0 0
    %168 = vmatpush2.bf16.msra.mxu0 0
    %169 = vmatprep.subr.bf16.mxu0 0
    %170 = vmatpush2.bf16.msra.mxu0 0
    %171 = vmatprep.subr.bf16.mxu0 0
    %172 = vmatpush2.bf16.msra.mxu0 0
    %173 = vmatprep.mubr.bf16.mxu0 0
    %174 = vmatmul.mubr.bf16.gmra.mxu0 %v69
    %v175 = vpop.f32.mrf.mxu0
    %v176 = vadd.f32 %v91, %v175
    %v177 = vpop.f32.mrf.mxu0
    %v178 = vpop.f32.mrf.mxu0
    %v179 = vpop.f32.mrf.mxu0
    %180 = vdwg.mxu0
    %v181 = vmax.f32 %v176, 0.0
    %v182 = vpack.c.bf16 %v181, %v181
    %v183 = vld [vmem:[#allocation4] sm:$0xf]
    %v184 = vld [vmem:[#allocation4 + $0x4] sm:$0xf]
    %v185 = vld [vmem:[#allocation4 + $0x8] sm:$0xf]
    %v186 = vld [vmem:[#allocation4 + $0xc] sm:$0xf]
    %v187 = vld [vmem:[#allocation4 + $0x10] sm:$0xf]
    %v188 = vld [vmem:[#allocation4 + $0x14] sm:$0xf]
    %v189 = vld [vmem:[#allocation4 + $0x18] sm:$0xf]
    %v190 = vld [vmem:[#allocation4 + $0x1c] sm:$0xf]
    %v191 = vld [vmem:[#allocation4 + $0x20] sm:$0xf]
    %v192 = vld [vmem:[#allocation4 + $0x24] sm:$0xf]
    %v193 = vld [vmem:[#allocation4 + $0x28] sm:$0xf]
    %v194 = vld [vmem:[#allocation4 + $0x2c] sm:$0xf]
    %v195 = vld [vmem:[#allocation4 + $0x30] sm:$0xf]
    %v196 = vld [vmem:[#allocation4 + $0x34] sm:$0xf]
    %v197 = vld [vmem:[#allocation4 + $0x38] sm:$0xf]
    %v198 = vld [vmem:[#allocation4 + $0x3c] sm:$0xf]
    %v199 = vld [vmem:[%s4] sm:$0x1]
    %v201 = vlaneseq
    %v202 = vshrl.u32 %v201, 7
    %v203 = vsub.s32 0, %v202
    %v204 = vrot.slane %v199, %v203
    %v222 = vunpack.c.l.b16 %v183
    %v223 = vunpack.c.l.b16 %v184
    %v224 = vunpack.c.l.b16 %v185
    %v225 = vunpack.c.l.b16 %v186
    %v226 = vunpack.c.l.b16 %v187
    %v227 = vunpack.c.l.b16 %v188
    %v228 = vunpack.c.l.b16 %v189
    %v229 = vunpack.c.l.b16 %v190
    %v230 = vunpack.c.l.b16 %v191
    %v231 = vunpack.c.l.b16 %v192
    %v232 = vunpack.c.l.b16 %v193
    %v233 = vunpack.c.l.b16 %v194
    %v234 = vunpack.c.l.b16 %v195
    %v235 = vunpack.c.l.b16 %v196
    %v236 = vunpack.c.l.b16 %v197
    %v237 = vunpack.c.l.b16 %v198
    %v238 = vpack.c.b16 %v223, %v222
    %v239 = vpack.c.b16 %v225, %v224
    %v240 = vpack.c.b16 %v227, %v226
    %v241 = vpack.c.b16 %v229, %v228
    %v242 = vpack.c.b16 %v231, %v230
    %v243 = vpack.c.b16 %v233, %v232
    %v244 = vpack.c.b16 %v235, %v234
    %v245 = vpack.c.b16 %v237, %v236
    %254 = vmatprep.subr.bf16.mxu0 0
    %255 = vmatpush1.bf16.msra.mxu0 %v245
    %256 = vmatprep.subr.bf16.mxu0 0
    %257 = vmatpush1.bf16.msra.mxu0 %v244
    %258 = vmatprep.subr.bf16.mxu0 0
    %259 = vmatpush1.bf16.msra.mxu0 %v243
    %260 = vmatprep.subr.bf16.mxu0 0
    %261 = vmatpush1.bf16.msra.mxu0 %v242
    %262 = vmatprep.subr.bf16.mxu0 0
    %263 = vmatpush1.bf16.msra.mxu0 %v241
    %264 = vmatprep.subr.bf16.mxu0 0
    %265 = vmatpush1.bf16.msra.mxu0 %v240
    %266 = vmatprep.subr.bf16.mxu0 0
    %267 = vmatpush1.bf16.msra.mxu0 %v239
    %268 = vmatprep.subr.bf16.mxu0 0
    %269 = vmatpush1.bf16.msra.mxu0 %v238
    %270 = vmatprep.subr.bf16.mxu0 0
    %271 = vmatpush2.bf16.msra.mxu0 0
    %272 = vmatprep.subr.bf16.mxu0 0
    %273 = vmatpush2.bf16.msra.mxu0 0
    %274 = vmatprep.subr.bf16.mxu0 0
    %275 = vmatpush2.bf16.msra.mxu0 0
    %276 = vmatprep.subr.bf16.mxu0 0
    %277 = vmatpush2.bf16.msra.mxu0 0
    %278 = vmatprep.subr.bf16.mxu0 0
    %279 = vmatpush2.bf16.msra.mxu0 0
    %280 = vmatprep.subr.bf16.mxu0 0
    %281 = vmatpush2.bf16.msra.mxu0 0
    %282 = vmatprep.subr.bf16.mxu0 0
    %283 = vmatpush2.bf16.msra.mxu0 0
    %284 = vmatprep.subr.bf16.mxu0 0
    %285 = vmatpush2.bf16.msra.mxu0 0
    %286 = vmatprep.mubr.bf16.mxu0 0
    %287 = vmatmul.mubr.bf16.gmra.mxu0 %v182
    %v288 = vpop.f32.mrf.mxu0
    %v289 = vadd.f32 %v204, %v288
    %v290 = vpop.f32.mrf.mxu0
    %v291 = vpop.f32.mrf.mxu0
    %v292 = vpop.f32.mrf.mxu0
    %293 = vdwg.mxu0
    %v294 = vmax.f32 %v289, 0.0
    %v295 = vpack.c.bf16 %v294, %v294
    %v296 = vld [vmem:[#allocation6] sm:$0xf]
    %v297 = vld [vmem:[#allocation6 + $0x4] sm:$0xf]
    %v298 = vld [vmem:[#allocation6 + $0x8] sm:$0xf]
    %v299 = vld [vmem:[#allocation6 + $0xc] sm:$0xf]
    %v300 = vld [vmem:[#allocation6 + $0x10] sm:$0xf]
    %v301 = vld [vmem:[#allocation6 + $0x14] sm:$0xf]
    %v302 = vld [vmem:[#allocation6 + $0x18] sm:$0xf]
    %v303 = vld [vmem:[#allocation6 + $0x1c] sm:$0xf]
    %v304 = vld [vmem:[#allocation6 + $0x20] sm:$0xf]
    %v305 = vld [vmem:[#allocation6 + $0x24] sm:$0xf]
    %v306 = vld [vmem:[#allocation6 + $0x28] sm:$0xf]
    %v307 = vld [vmem:[#allocation6 + $0x2c] sm:$0xf]
    %v308 = vld [vmem:[#allocation6 + $0x30] sm:$0xf]
    %v309 = vld [vmem:[#allocation6 + $0x34] sm:$0xf]
    %v310 = vld [vmem:[#allocation6 + $0x38] sm:$0xf]
    %v311 = vld [vmem:[#allocation6 + $0x3c] sm:$0xf]
    %v312 = vld [vmem:[%s6] sm:$0x1]
    %v314 = vlaneseq
    %v315 = vshrl.u32 %v314, 7
    %v316 = vsub.s32 0, %v315
    %v317 = vrot.slane %v312, %v316
    %v335 = vunpack.c.l.b16 %v296
    %v336 = vunpack.c.l.b16 %v297
    %v337 = vunpack.c.l.b16 %v298
    %v338 = vunpack.c.l.b16 %v299
    %v339 = vunpack.c.l.b16 %v300
    %v340 = vunpack.c.l.b16 %v301
    %v341 = vunpack.c.l.b16 %v302
    %v342 = vunpack.c.l.b16 %v303
    %v343 = vunpack.c.l.b16 %v304
    %v344 = vunpack.c.l.b16 %v305
    %v345 = vunpack.c.l.b16 %v306
    %v346 = vunpack.c.l.b16 %v307
    %v347 = vunpack.c.l.b16 %v308
    %v348 = vunpack.c.l.b16 %v309
    %v349 = vunpack.c.l.b16 %v310
    %v350 = vunpack.c.l.b16 %v311
    %v351 = vpack.c.b16 %v336, %v335
    %v352 = vpack.c.b16 %v338, %v337
    %v353 = vpack.c.b16 %v340, %v339
    %v354 = vpack.c.b16 %v342, %v341
    %v355 = vpack.c.b16 %v344, %v343
    %v356 = vpack.c.b16 %v346, %v345
    %v357 = vpack.c.b16 %v348, %v347
    %v358 = vpack.c.b16 %v350, %v349
    %367 = vmatprep.subr.bf16.mxu0 0
    %368 = vmatpush1.bf16.msra.mxu0 %v358
    %369 = vmatprep.subr.bf16.mxu0 0
    %370 = vmatpush1.bf16.msra.mxu0 %v357
    %371 = vmatprep.subr.bf16.mxu0 0
    %372 = vmatpush1.bf16.msra.mxu0 %v356
    %373 = vmatprep.subr.bf16.mxu0 0
    %374 = vmatpush1.bf16.msra.mxu0 %v355
    %375 = vmatprep.subr.bf16.mxu0 0
    %376 = vmatpush1.bf16.msra.mxu0 %v354
    %377 = vmatprep.subr.bf16.mxu0 0
    %378 = vmatpush1.bf16.msra.mxu0 %v353
    %379 = vmatprep.subr.bf16.mxu0 0
    %380 = vmatpush1.bf16.msra.mxu0 %v352
    %381 = vmatprep.subr.bf16.mxu0 0
    %382 = vmatpush1.bf16.msra.mxu0 %v351
    %383 = vmatprep.subr.bf16.mxu0 0
    %384 = vmatpush2.bf16.msra.mxu0 0
    %385 = vmatprep.subr.bf16.mxu0 0
    %386 = vmatpush2.bf16.msra.mxu0 0
    %387 = vmatprep.subr.bf16.mxu0 0
    %388 = vmatpush2.bf16.msra.mxu0 0
    %389 = vmatprep.subr.bf16.mxu0 0
    %390 = vmatpush2.bf16.msra.mxu0 0
    %391 = vmatprep.subr.bf16.mxu0 0
    %392 = vmatpush2.bf16.msra.mxu0 0
    %393 = vmatprep.subr.bf16.mxu0 0
    %394 = vmatpush2.bf16.msra.mxu0 0
    %395 = vmatprep.subr.bf16.mxu0 0
    %396 = vmatpush2.bf16.msra.mxu0 0
    %397 = vmatprep.subr.bf16.mxu0 0
    %398 = vmatpush2.bf16.msra.mxu0 0
    %399 = vmatprep.mubr.bf16.mxu0 0
    %400 = vmatmul.mubr.bf16.gmra.mxu0 %v295
    %v401 = vpop.f32.mrf.mxu0
    %v402 = vadd.f32 %v317, %v401
    %v403 = vpop.f32.mrf.mxu0
    %v404 = vpop.f32.mrf.mxu0
    %v405 = vpop.f32.mrf.mxu0
    %406 = vdwg.mxu0
    %407 = vst [vmem:[%s7] sm:$0xff] %v402
    // Predicated region
    $region42: #{linear_qnet_forward.1} parent=1 // pred_check
      _
    $region43: #{linear_qnet_forward.1} parent=1 // pred_check_branch
      %409 = sbr.rel (0) target = $region45
    $region44: #{linear_qnet_forward.1} parent=1 // pred_region
      _
    $region45: #{linear_qnet_forward.1} parent=1 // pred_fallthru
      _
    // Predicated region
    $region46: #{linear_qnet_forward.1} parent=1 // pred_check
      _
    $region47: #{linear_qnet_forward.1} parent=1 // pred_check_branch
      %411 = sbr.rel (0) target = $region49
    $region48: #{linear_qnet_forward.1} parent=1 // pred_region
      _
    $region49: #{linear_qnet_forward.1} parent=1 // pred_fallthru
      _
    %412 = vsyncpa [#allocation3], 1
    %413 = vsyncpa [#allocation5], 1

</llo_original>
